<compile_context>
chip_gen: v7x
topology: tpu7x:2x2x1
jax: 0.10.0
libtpu: 0.0.40
codegen_flags: <defaults>
</compile_context>

<pallas_src>
import functools

import jax
import jax.numpy as jnp
from jax.experimental import pallas as pl
from jax.experimental.pallas import tpu as pltpu


def _round_up(x, m):
    return ((x + m - 1) // m) * m


# --------------------------------------------------------------------------
# Kernel: one batch tile of rows.
#   x1:[TB,d1], x2:[TB,d2], w1a:[d1,d3], w1b:[d2,d3], b1:[1,d3],
#   w2:[d3,d4], b2:[1,d4], out:[TB,d4]
# --------------------------------------------------------------------------
def _merge_layer_kernel(x1_ref, x2_ref, w1a_ref, w1b_ref, b1_ref,
                        w2_ref, b2_ref, out_ref):
    cdt = w1a_ref.dtype
    # fc1 split across the concat boundary: [x1 x2] @ w1 == x1@w1a + x2@w1b.
    h = jnp.dot(x1_ref[...].astype(cdt), w1a_ref[...],
                preferred_element_type=jnp.float32)
    h = h + jnp.dot(x2_ref[...].astype(cdt), w1b_ref[...],
                    preferred_element_type=jnp.float32)
    h = jnp.maximum(h + b1_ref[...], 0.0)            # bias + ReLU in f32 (VPU)
    o = jnp.dot(h.astype(cdt), w2_ref[...],
                preferred_element_type=jnp.float32)
    out_ref[...] = (o + b2_ref[...]).astype(out_ref.dtype)


# --------------------------------------------------------------------------
# One-time parameter preparation: split w1 at the concat boundary and cast
# to the compute dtype.  No padding is needed anywhere.
# --------------------------------------------------------------------------
def prepare_merge_layer_params(params, dim1, compute_dtype=jnp.float32):
    w1, b1, w2, b2 = params["w1"], params["b1"], params["w2"], params["b2"]
    K, dim3 = w1.shape
    dim3_2, dim4 = w2.shape
    assert dim3 == dim3_2 and 0 < dim1 < K
    return {
        "w1a": w1[:dim1].astype(compute_dtype),      # (dim1, dim3)
        "w1b": w1[dim1:].astype(compute_dtype),      # (dim2, dim3)
        "b1": b1.reshape(1, dim3).astype(jnp.float32),
        "w2": w2.astype(compute_dtype),              # (dim3, dim4)
        "b2": b2.reshape(1, dim4).astype(jnp.float32),
        "dim1": dim1, "dim2": K - dim1, "dim3": dim3, "dim4": dim4,
        "compute_dtype": compute_dtype,
    }


# --------------------------------------------------------------------------
# Forward wrapper: mirrors MergeLayer.forward.
# --------------------------------------------------------------------------
def merge_layer(x1, x2, prepared, *, max_batch_tile=1024):
    # Mirror torch's `if x1.shape[0] != x2.shape[0]: x1 = x1.view([B, -1])`.
    if x1.shape[0] != x2.shape[0]:
        assert x1.size % x2.shape[0] == 0, "x1 cannot be reshaped to x2 batch"
        x1 = jnp.reshape(x1, (x2.shape[0], -1))

    B = x1.shape[0]
    dim1, dim2 = prepared["dim1"], prepared["dim2"]
    dim3, dim4 = prepared["dim3"], prepared["dim4"]
    assert x1.shape[1] == dim1 and x2.shape[1] == dim2, \
        "feature dims do not match prepared params"

    out_dtype = x1.dtype

    # Batch tile: big enough for efficient DMAs, but aim for >= 2 grid steps
    # when B allows it so the "parallel" axis can shard rows across v7x's
    # two TensorCores.  Multiple of 16 keeps sublane packing legal for both
    # f32 and bf16 inputs; TB == B (full dim) is always legal.
    if B <= 16:
        TB = B
    else:
        TB = min(max_batch_tile, _round_up(pl.cdiv(B, 2), 16))
    grid = (pl.cdiv(B, TB),)

    w1a, w1b = prepared["w1a"], prepared["w1b"]
    b1, w2, b2 = prepared["b1"], prepared["w2"], prepared["b2"]

    nbytes = lambda a: a.size * a.dtype.itemsize
    cost = pl.CostEstimate(
        flops=2 * B * dim3 * (dim1 + dim2) + 2 * B * dim3 * dim4,
        transcendentals=0,
        bytes_accessed=(nbytes(x1) + nbytes(x2)
                        + nbytes(w1a) + nbytes(w1b) + nbytes(b1)
                        + nbytes(w2) + nbytes(b2)
                        + B * dim4 * jnp.dtype(out_dtype).itemsize),
    )

    return pl.pallas_call(
        _merge_layer_kernel,
        out_shape=jax.ShapeDtypeStruct((B, dim4), out_dtype),
        grid=grid,
        in_specs=[
            pl.BlockSpec((TB, dim1), lambda i: (i, 0)),    # x1 tile (pipelined)
            pl.BlockSpec((TB, dim2), lambda i: (i, 0)),    # x2 tile (pipelined)
            pl.BlockSpec((dim1, dim3), lambda i: (0, 0)),  # w1a (resident)
            pl.BlockSpec((dim2, dim3), lambda i: (0, 0)),  # w1b (resident)
            pl.BlockSpec((1, dim3), lambda i: (0, 0)),     # b1  (resident)
            pl.BlockSpec((dim3, dim4), lambda i: (0, 0)),  # w2  (resident)
            pl.BlockSpec((1, dim4), lambda i: (0, 0)),     # b2  (resident)
        ],
        out_specs=pl.BlockSpec((TB, dim4), lambda i: (i, 0)),
        compiler_params=pltpu.CompilerParams(
            dimension_semantics=("parallel",),
            vmem_limit_bytes=32 * 1024 * 1024,
        ),
        cost_estimate=cost,
    )(x1, x2, w1a, w1b, b1, w2, b2)


# --------------------------------------------------------------------------
# Init mirroring the PyTorch module's __init__ (weights stored [in, out]).
# --------------------------------------------------------------------------
def init_merge_layer_params(key, dim1, dim2, dim3, dim4, dtype=jnp.float32):
    k1, k2, k3, k4 = jax.random.split(key, 4)
    fan_in1, fan_out1 = dim1 + dim2, dim3
    fan_in2, fan_out2 = dim3, dim4
    std1 = (2.0 / (fan_in1 + fan_out1)) ** 0.5      # xavier_normal_
    std2 = (2.0 / (fan_in2 + fan_out2)) ** 0.5
    w1 = std1 * jax.random.normal(k1, (fan_in1, fan_out1), dtype)
    w2 = std2 * jax.random.normal(k2, (fan_in2, fan_out2), dtype)
    bnd1 = 1.0 / (fan_in1 ** 0.5)                   # Linear default bias init
    bnd2 = 1.0 / (fan_in2 ** 0.5)
    b1 = jax.random.uniform(k3, (dim3,), dtype, -bnd1, bnd1)
    b2 = jax.random.uniform(k4, (dim4,), dtype, -bnd2, bnd2)
    return {"w1": w1, "b1": b1, "w2": w2, "b2": b2}


# --------------------------------------------------------------------------
# Pure-JAX reference (float32).
# --------------------------------------------------------------------------
def _reference_f32(x1, x2, params):
    if x1.shape[0] != x2.shape[0]:
        x1 = jnp.reshape(x1, (x2.shape[0], -1))
    x = jnp.concatenate([x1, x2], axis=1)
    h = jnp.maximum(
        jnp.dot(x, params["w1"], precision=jax.lax.Precision.HIGHEST)
        + params["b1"], 0.0)
    return (jnp.dot(h, params["w2"], precision=jax.lax.Precision.HIGHEST)
            + params["b2"])


if __name__ == "__main__":
    key = jax.random.PRNGKey(0)
    kp, kx1, kx2, kx3, kx4 = jax.random.split(key, 5)

    # Small shapes consistent with the module's forward.
    batch, dim1, dim2, dim3, dim4 = 8, 16, 16, 32, 8

    params = init_merge_layer_params(kp, dim1, dim2, dim3, dim4)
    prepared = prepare_merge_layer_params(params, dim1)   # f32 compute path

    fwd = jax.jit(functools.partial(merge_layer, prepared=prepared))

    # Case 1: small batch (single grid step).
    x1 = jax.random.normal(kx1, (batch, dim1), jnp.float32)
    x2 = jax.random.normal(kx2, (batch, dim2), jnp.float32)
    out = fwd(x1, x2)
    jax.block_until_ready(out)
    assert out.shape == (batch, dim4)
    ref = _reference_f32(x1, x2, params)
    assert jnp.allclose(out, ref, atol=1e-2, rtol=1e-2)

    # Case 2: larger batch exercising multiple grid steps + trailing partial
    # block (Pallas discards out-of-bounds output rows).
    big = 200
    y1 = jax.random.normal(kx3, (big, dim1), jnp.float32)
    y2 = jax.random.normal(kx4, (big, dim2), jnp.float32)
    out2 = fwd(y1, y2)
    jax.block_until_ready(out2)
    assert out2.shape == (big, dim4)
    ref2 = _reference_f32(y1, y2, params)
    assert jnp.allclose(out2, ref2, atol=1e-2, rtol=1e-2)

    print("KERNEL_OK")
</pallas_src>

<mosaic_0001>
module attributes {stable_mosaic.version = 11 : i64} {
  func.func @_merge_layer_kernel(%arg0: i32, %arg1: memref<8x16xf32, #tpu.memory_space<vmem>>, %arg2: memref<8x16xf32, #tpu.memory_space<vmem>>, %arg3: memref<16x32xf32, #tpu.memory_space<vmem>>, %arg4: memref<16x32xf32, #tpu.memory_space<vmem>>, %arg5: memref<1x32xf32, #tpu.memory_space<vmem>>, %arg6: memref<32x8xf32, #tpu.memory_space<vmem>>, %arg7: memref<1x8xf32, #tpu.memory_space<vmem>>, %arg8: memref<8x8xf32, #tpu.memory_space<vmem>>) attributes {dimension_semantics = [#tpu.dimension_semantics<parallel>], iteration_bounds = array<i64: 1>, scalar_prefetch = 0 : i64, scratch_operands = 0 : i64, tpu.core_type = #tpu.core_type<tc>, window_params = [{transform_indices = @transform_0, window_bounds = array<i64: 8, 16>}, {transform_indices = @transform_1, window_bounds = array<i64: 8, 16>}, {pipeline_mode = #tpu.pipeline_mode<synchronous>, transform_indices = @transform_2, window_bounds = array<i64: 16, 32>}, {pipeline_mode = #tpu.pipeline_mode<synchronous>, transform_indices = @transform_3, window_bounds = array<i64: 16, 32>}, {pipeline_mode = #tpu.pipeline_mode<synchronous>, transform_indices = @transform_4, window_bounds = array<i64: 1, 32>}, {pipeline_mode = #tpu.pipeline_mode<synchronous>, transform_indices = @transform_5, window_bounds = array<i64: 32, 8>}, {pipeline_mode = #tpu.pipeline_mode<synchronous>, transform_indices = @transform_6, window_bounds = array<i64: 1, 8>}, {transform_indices = @transform_7, window_bounds = array<i64: 8, 8>}]} {
    %c0 = arith.constant 0 : index
    %c0_0 = arith.constant 0 : index
    %0 = vector.load %arg1[%c0, %c0_0] : memref<8x16xf32, #tpu.memory_space<vmem>>, vector<8x16xf32>
    %c0_1 = arith.constant 0 : index
    %c0_2 = arith.constant 0 : index
    %1 = vector.load %arg3[%c0_1, %c0_2] : memref<16x32xf32, #tpu.memory_space<vmem>>, vector<16x32xf32>
    %cst = arith.constant dense<0.000000e+00> : vector<8x32xf32>
    %2 = tpu.matmul %0, %1, %cst {dimension_numbers = #tpu.dot_dimension_numbers<[1], [0], [0], [1], [0, 0, 1, 1], [], []>} : vector<8x16xf32>, vector<16x32xf32>, vector<8x32xf32> -> vector<8x32xf32>
    %c0_3 = arith.constant 0 : index
    %c0_4 = arith.constant 0 : index
    %3 = vector.load %arg2[%c0_3, %c0_4] : memref<8x16xf32, #tpu.memory_space<vmem>>, vector<8x16xf32>
    %c0_5 = arith.constant 0 : index
    %c0_6 = arith.constant 0 : index
    %4 = vector.load %arg4[%c0_5, %c0_6] : memref<16x32xf32, #tpu.memory_space<vmem>>, vector<16x32xf32>
    %cst_7 = arith.constant dense<0.000000e+00> : vector<8x32xf32>
    %5 = tpu.matmul %3, %4, %cst_7 {dimension_numbers = #tpu.dot_dimension_numbers<[1], [0], [0], [1], [0, 0, 1, 1], [], []>} : vector<8x16xf32>, vector<16x32xf32>, vector<8x32xf32> -> vector<8x32xf32>
    %6 = arith.addf %2, %5 : vector<8x32xf32>
    %c0_8 = arith.constant 0 : index
    %c0_9 = arith.constant 0 : index
    %7 = vector.load %arg5[%c0_8, %c0_9] : memref<1x32xf32, #tpu.memory_space<vmem>>, vector<1x32xf32>
    %8 = vector.broadcast %7 : vector<1x32xf32> to vector<8x32xf32>
    %9 = arith.addf %6, %8 : vector<8x32xf32>
    %cst_10 = arith.constant 0.000000e+00 : f32
    %10 = vector.broadcast %cst_10 : f32 to vector<8x32xf32>
    %11 = arith.maximumf %9, %10 : vector<8x32xf32>
    %c0_11 = arith.constant 0 : index
    %c0_12 = arith.constant 0 : index
    %12 = vector.load %arg6[%c0_11, %c0_12] : memref<32x8xf32, #tpu.memory_space<vmem>>, vector<32x8xf32>
    %cst_13 = arith.constant dense<0.000000e+00> : vector<8x8xf32>
    %13 = tpu.matmul %11, %12, %cst_13 {dimension_numbers = #tpu.dot_dimension_numbers<[1], [0], [0], [1], [0, 0, 1, 1], [], []>} : vector<8x32xf32>, vector<32x8xf32>, vector<8x8xf32> -> vector<8x8xf32>
    %c0_14 = arith.constant 0 : index
    %c0_15 = arith.constant 0 : index
    %14 = vector.load %arg7[%c0_14, %c0_15] : memref<1x8xf32, #tpu.memory_space<vmem>>, vector<1x8xf32>
    %15 = vector.broadcast %14 : vector<1x8xf32> to vector<8x8xf32>
    %16 = arith.addf %13, %15 : vector<8x8xf32>
    %c0_16 = arith.constant 0 : index
    %c0_17 = arith.constant 0 : index
    %17 = vector.load %arg8[%c0_16, %c0_17] : memref<8x8xf32, #tpu.memory_space<vmem>>, vector<8x8xf32>
    tpu.vector_store %arg8[%c0_16, %c0_17], %16 {strides = array<i32>} : memref<8x8xf32, #tpu.memory_space<vmem>>, vector<8x8xf32>,
    return
  }
  func.func @transform_0(%arg0: i32) -> (i32, i32) {
    %c0_i32 = arith.constant 0 : i32
    %c0_i32_0 = arith.constant 0 : i32
    return %arg0, %c0_i32 : i32, i32
  }
  func.func @transform_1(%arg0: i32) -> (i32, i32) {
    %c0_i32 = arith.constant 0 : i32
    %c0_i32_0 = arith.constant 0 : i32
    return %arg0, %c0_i32 : i32, i32
  }
  func.func @transform_2(%arg0: i32) -> (i32, i32) {
    %c0_i32 = arith.constant 0 : i32
    %c0_i32_0 = arith.constant 0 : i32
    %c0_i32_1 = arith.constant 0 : i32
    return %c0_i32, %c0_i32_0 : i32, i32
  }
  func.func @transform_3(%arg0: i32) -> (i32, i32) {
    %c0_i32 = arith.constant 0 : i32
    %c0_i32_0 = arith.constant 0 : i32
    %c0_i32_1 = arith.constant 0 : i32
    return %c0_i32, %c0_i32_0 : i32, i32
  }
  func.func @transform_4(%arg0: i32) -> (i32, i32) {
    %c0_i32 = arith.constant 0 : i32
    %c0_i32_0 = arith.constant 0 : i32
    %c0_i32_1 = arith.constant 0 : i32
    return %c0_i32, %c0_i32_0 : i32, i32
  }
  func.func @transform_5(%arg0: i32) -> (i32, i32) {
    %c0_i32 = arith.constant 0 : i32
    %c0_i32_0 = arith.constant 0 : i32
    %c0_i32_1 = arith.constant 0 : i32
    return %c0_i32, %c0_i32_0 : i32, i32
  }
  func.func @transform_6(%arg0: i32) -> (i32, i32) {
    %c0_i32 = arith.constant 0 : i32
    %c0_i32_0 = arith.constant 0 : i32
    %c0_i32_1 = arith.constant 0 : i32
    return %c0_i32, %c0_i32_0 : i32, i32
  }
  func.func @transform_7(%arg0: i32) -> (i32, i32) {
    %c0_i32 = arith.constant 0 : i32
    %c0_i32_0 = arith.constant 0 : i32
    return %arg0, %c0_i32 : i32, i32
  }
}

</mosaic_0001>

<llo_original>
// kernel: merge_layer.1
$region0: #{merge_layer.1}
  #allocation0 [shape = 'u32[]', space=smem, size = 0x4, offset = 0x4, fixed_abs, tag = 'smem constant byte address 0x4 - core index']
  #allocation1 [shape = 'u32[144,128]{1,0:T(1,128)}', space=vmem, size = 0x12000, scoped, tag = 'internal scratch']
  %s0 = inlined_call_operand.hbm [shape: f32[8,16], index: 0, kind: input, shape index: {}]
  %s1 = inlined_call_operand.hbm [shape: f32[8,16], index: 1, kind: input, shape index: {}]
  %s2 = inlined_call_operand.hbm [shape: f32[16,32], index: 2, kind: input, shape index: {}]
  %s3 = inlined_call_operand.hbm [shape: f32[16,32], index: 3, kind: input, shape index: {}]
  %s4 = inlined_call_operand.vmem [shape: f32[1,32], index: 4, kind: input, shape index: {}]
  %s5 = inlined_call_operand.hbm [shape: f32[32,8], index: 5, kind: input, shape index: {}]
  %s6 = inlined_call_operand.vmem [shape: f32[1,8], index: 6, kind: input, shape index: {}]
  %s7 = inlined_call_operand.hbm [shape: f32[8,8], index: 7, kind: output, shape index: {}]
  %s8 = sld [smem:[#allocation0]]
  $region58: #{merge_layer.1} parent=0
    _
  %s10 = ssub.s32 1, %s8
  %s11 = scalar_select 0, %s10, %s8
  $region1: #{merge_layer.1} parent=0
    #allocation2 [shape = 'u8[4096]{0}', space=vmem, size = 0x1000, scoped, tag = 'input window, operand 0, single buffered']
    #allocation3 [shape = 's32[1]{0}', space=sflag, size = 0x4, scoped, tag = 'scoped memory for merge_layer.1']
    #allocation4 [shape = 's32[1]{0}', space=sflag, size = 0x4, scoped, tag = 'scoped memory for merge_layer.1']
    #allocation5 [shape = 'u8[4096]{0}', space=vmem, size = 0x1000, scoped, tag = 'input window, operand 1, single buffered']
    #allocation6 [shape = 's32[1]{0}', space=sflag, size = 0x4, scoped, tag = 'scoped memory for merge_layer.1']
    #allocation7 [shape = 'u8[8192]{0}', space=vmem, size = 0x2000, scoped, tag = 'input window, operand 2, single buffered']
    #allocation8 [shape = 'u8[8192]{0}', space=vmem, size = 0x2000, scoped, tag = 'input window, operand 3, single buffered']
    #allocation9 [shape = 's32[1]{0}', space=sflag, size = 0x4, scoped, tag = 'scoped memory for merge_layer.1']
    #allocation10 [shape = 'u8[16384]{0}', space=vmem, size = 0x4000, scoped, tag = 'input window, operand 5, single buffered']
    #allocation11 [shape = 'u8[4096]{0}', space=vmem, size = 0x1000, scoped, tag = 'output window, operand 0, single buffered']
    %12 = vsyncpa [#allocation3], 0
    %13 = vsyncpa [#allocation6], 0
    %14 = vsyncpa [#allocation9], 0
    %15 = vsyncpa [#allocation4], 0
    // Predicated region
    $region2: #{merge_layer.1} parent=1 // pred_check
      _
    $region3: #{merge_layer.1} parent=1 // pred_check_branch
      %17 = sbr.rel (0) target = $region5
    $region4: #{merge_layer.1} parent=1 // pred_region
      %s19 = ssub.s32 128, 128
      %20 = vsyncadd [#allocation3], %s19
      %s22 = sshll.u32 [#allocation2], 4
      %s23 = int_to_ptr.vmem [resolvable:$true] %s22
      %25 = dma.hbm_to_vmem [thread:$0]  %s0, 128, %s23, [#allocation3]
    $region5: #{merge_layer.1} parent=1 // pred_fallthru
      _
    // Predicated region
    $region6: #{merge_layer.1} parent=1 // pred_check
      _
    $region7: #{merge_layer.1} parent=1 // pred_check_branch
      %27 = sbr.rel (0) target = $region9
    $region8: #{merge_layer.1} parent=1 // pred_region
      %s29 = ssub.s32 128, 128
      %30 = vsyncadd [#allocation6], %s29
      %s32 = sshll.u32 [#allocation5], 4
      %s33 = int_to_ptr.vmem [resolvable:$true] %s32
      %35 = dma.hbm_to_vmem [thread:$0]  %s1, 128, %s33, [#allocation6]
    $region9: #{merge_layer.1} parent=1 // pred_fallthru
      _
    // Predicated region
    $region10: #{merge_layer.1} parent=1 // pred_check
      _
    $region11: #{merge_layer.1} parent=1 // pred_check_branch
      %37 = sbr.rel (0) target = $region13
    $region12: #{merge_layer.1} parent=1 // pred_region
      %s39 = ssub.s32 256, 256
      %40 = vsyncadd [#allocation6], %s39
      %s41 = sshll.u32 [#allocation7], 4
      %s42 = int_to_ptr.vmem [resolvable:$true] %s41
      %47 = dma.hbm_to_vmem [thread:$0]  %s2, 256, %s42, [#allocation6], 128, 128, 8
    $region13: #{merge_layer.1} parent=1 // pred_fallthru
      _
    // Predicated region
    $region14: #{merge_layer.1} parent=1 // pred_check
      _
    $region15: #{merge_layer.1} parent=1 // pred_check_branch
      %49 = sbr.rel (0) target = $region17
    $region16: #{merge_layer.1} parent=1 // pred_region
      %s51 = ssub.s32 256, 256
      %52 = vsyncadd [#allocation9], %s51
      %s53 = sshll.u32 [#allocation8], 4
      %s54 = int_to_ptr.vmem [resolvable:$true] %s53
      %59 = dma.hbm_to_vmem [thread:$0]  %s3, 256, %s54, [#allocation9], 128, 128, 8
    $region17: #{merge_layer.1} parent=1 // pred_fallthru
      _
    // Predicated region
    $region18: #{merge_layer.1} parent=1 // pred_check
      _
    $region19: #{merge_layer.1} parent=1 // pred_check_branch
      %61 = sbr.rel (0) target = $region21
    $region20: #{merge_layer.1} parent=1 // pred_region
      _
    $region21: #{merge_layer.1} parent=1 // pred_fallthru
      _
    // Predicated region
    $region22: #{merge_layer.1} parent=1 // pred_check
      _
    $region23: #{merge_layer.1} parent=1 // pred_check_branch
      %63 = sbr.rel (0) target = $region25
    $region24: #{merge_layer.1} parent=1 // pred_region
      %s65 = ssub.s32 512, 512
      %66 = vsyncadd [#allocation9], %s65
      %s67 = sshll.u32 [#allocation10], 4
      %s68 = int_to_ptr.vmem [resolvable:$true] %s67
      %73 = dma.hbm_to_vmem [thread:$0]  %s5, 512, %s68, [#allocation9], 128, 128, 8
    $region25: #{merge_layer.1} parent=1 // pred_fallthru
      _
    // Predicated region
    $region26: #{merge_layer.1} parent=1 // pred_check
      _
    $region27: #{merge_layer.1} parent=1 // pred_check_branch
      %75 = sbr.rel (0) target = $region29
    $region28: #{merge_layer.1} parent=1 // pred_region
      _
    $region29: #{merge_layer.1} parent=1 // pred_fallthru
      _
    // Predicated region
    $region30: #{merge_layer.1} parent=1 // pred_check
      _
    $region31: #{merge_layer.1} parent=1 // pred_check_branch
      %77 = sbr.rel (0) target = $region33
    $region32: #{merge_layer.1} parent=1 // pred_region
      %78 = dma.done [#allocation3], 128
    $region33: #{merge_layer.1} parent=1 // pred_fallthru
      _
    // Predicated region
    $region34: #{merge_layer.1} parent=1 // pred_check
      _
    $region35: #{merge_layer.1} parent=1 // pred_check_branch
      %80 = sbr.rel (0) target = $region37
    $region36: #{merge_layer.1} parent=1 // pred_region
      %81 = dma.done [#allocation6], 128
    $region37: #{merge_layer.1} parent=1 // pred_fallthru
      _
    // Predicated region
    $region38: #{merge_layer.1} parent=1 // pred_check
      _
    $region39: #{merge_layer.1} parent=1 // pred_check_branch
      %83 = sbr.rel (0) target = $region41
    $region40: #{merge_layer.1} parent=1 // pred_region
      %84 = dma.done [#allocation6], 256
    $region41: #{merge_layer.1} parent=1 // pred_fallthru
      _
    // Predicated region
    $region42: #{merge_layer.1} parent=1 // pred_check
      _
    $region43: #{merge_layer.1} parent=1 // pred_check_branch
      %86 = sbr.rel (0) target = $region45
    $region44: #{merge_layer.1} parent=1 // pred_region
      %87 = dma.done [#allocation9], 256
    $region45: #{merge_layer.1} parent=1 // pred_fallthru
      _
    // Predicated region
    $region46: #{merge_layer.1} parent=1 // pred_check
      _
    $region47: #{merge_layer.1} parent=1 // pred_check_branch
      %89 = sbr.rel (0) target = $region49
    $region48: #{merge_layer.1} parent=1 // pred_region
      %90 = dma.done [#allocation9], 512
    $region49: #{merge_layer.1} parent=1 // pred_fallthru
      _
    %v91 = vld [vmem:[#allocation2] sm:$0xff]
    %v92 = vld [vmem:[#allocation7] sm:$0xff]
    %v93 = vld [vmem:[#allocation7 + $0x8] sm:$0xff]
    %v94 = vld [vmem:[#allocation5] sm:$0xff]
    %v95 = vld [vmem:[#allocation8] sm:$0xff]
    %v96 = vld [vmem:[#allocation8 + $0x8] sm:$0xff]
    %vm97 = vcmask 130048
    %v99 = vsel %vm97, %v94, 0
    %101 = vmatprep.subr.mxu0 0.0
    %102 = vmatpush1.msra.mxu0 %v95
    %103 = vmatprep.subr.mxu0 0.0
    %104 = vmatpush1.msra.mxu0 %v96
    %105 = vmatprep.subr.mxu0 0.0
    %106 = vmatpush1.msra.mxu0 0.0
    %107 = vmatprep.subr.mxu0 0.0
    %108 = vmatpush1.msra.mxu0 0.0
    %109 = vmatprep.subr.mxu0 0.0
    %110 = vmatpush1.msra.mxu0 0.0
    %111 = vmatprep.subr.mxu0 0.0
    %112 = vmatpush1.msra.mxu0 0.0
    %113 = vmatprep.subr.mxu0 0.0
    %114 = vmatpush1.msra.mxu0 0.0
    %115 = vmatprep.subr.mxu0 0.0
    %116 = vmatpush1.msra.mxu0 0.0
    %117 = vmatprep.subr.mxu0 0.0
    %118 = vmatpush1.msra.mxu0 0.0
    %119 = vmatprep.subr.mxu0 0.0
    %120 = vmatpush1.msra.mxu0 0.0
    %121 = vmatprep.subr.mxu0 0.0
    %122 = vmatpush1.msra.mxu0 0.0
    %123 = vmatprep.subr.mxu0 0.0
    %124 = vmatpush1.msra.mxu0 0.0
    %125 = vmatprep.subr.mxu0 0.0
    %126 = vmatpush1.msra.mxu0 0.0
    %127 = vmatprep.subr.mxu0 0.0
    %128 = vmatpush1.msra.mxu0 0.0
    %129 = vmatprep.subr.mxu0 0.0
    %130 = vmatpush1.msra.mxu0 0.0
    %131 = vmatprep.subr.mxu0 0.0
    %132 = vmatpush1.msra.mxu0 0.0
    %133 = vmatprep.subr.mxu0 0.0
    %134 = vmatpush1.msra.mxu0 0.0
    %135 = vmatprep.subr.mxu0 0.0
    %136 = vmatpush1.msra.mxu0 0.0
    %137 = vmatprep.subr.mxu0 0.0
    %138 = vmatpush1.msra.mxu0 0.0
    %139 = vmatprep.subr.mxu0 0.0
    %140 = vmatpush1.msra.mxu0 0.0
    %141 = vmatprep.subr.mxu0 0.0
    %142 = vmatpush1.msra.mxu0 0.0
    %143 = vmatprep.subr.mxu0 0.0
    %144 = vmatpush1.msra.mxu0 0.0
    %145 = vmatprep.subr.mxu0 0.0
    %146 = vmatpush1.msra.mxu0 0.0
    %147 = vmatprep.subr.mxu0 0.0
    %148 = vmatpush1.msra.mxu0 0.0
    %149 = vmatprep.subr.mxu0 0.0
    %150 = vmatpush1.msra.mxu0 0.0
    %151 = vmatprep.subr.mxu0 0.0
    %152 = vmatpush1.msra.mxu0 0.0
    %153 = vmatprep.subr.mxu0 0.0
    %154 = vmatpush1.msra.mxu0 0.0
    %155 = vmatprep.subr.mxu0 0.0
    %156 = vmatpush1.msra.mxu0 0.0
    %157 = vmatprep.subr.mxu0 0.0
    %158 = vmatpush1.msra.mxu0 0.0
    %159 = vmatprep.subr.mxu0 0.0
    %160 = vmatpush1.msra.mxu0 0.0
    %161 = vmatprep.subr.mxu0 0.0
    %162 = vmatpush1.msra.mxu0 0.0
    %163 = vmatprep.subr.mxu0 0.0
    %164 = vmatpush1.msra.mxu0 0.0
    %165 = vmatprep.mubr.f32.mxu0 0.0
    %166 = vmatmul.mubr.f32.gmra.mrb[0].mxu0 %v99
    %v167 = vpop.f32.mrb[0].mxu0
    %v168 = vadd.f32 0.0, %v167
    %v169 = vpop.f32.mrb[0].mxu0
    %170 = vdwg.mxu0
    %v172 = vsel %vm97, %v91, 0
    %174 = vmatprep.subr.mxu0 0.0
    %175 = vmatpush1.msra.mxu0 %v92
    %176 = vmatprep.subr.mxu0 0.0
    %177 = vmatpush1.msra.mxu0 %v93
    %178 = vmatprep.subr.mxu0 0.0
    %179 = vmatpush1.msra.mxu0 0.0
    %180 = vmatprep.subr.mxu0 0.0
    %181 = vmatpush1.msra.mxu0 0.0
    %182 = vmatprep.subr.mxu0 0.0
    %183 = vmatpush1.msra.mxu0 0.0
    %184 = vmatprep.subr.mxu0 0.0
    %185 = vmatpush1.msra.mxu0 0.0
    %186 = vmatprep.subr.mxu0 0.0
    %187 = vmatpush1.msra.mxu0 0.0
    %188 = vmatprep.subr.mxu0 0.0
    %189 = vmatpush1.msra.mxu0 0.0
    %190 = vmatprep.subr.mxu0 0.0
    %191 = vmatpush1.msra.mxu0 0.0
    %192 = vmatprep.subr.mxu0 0.0
    %193 = vmatpush1.msra.mxu0 0.0
    %194 = vmatprep.subr.mxu0 0.0
    %195 = vmatpush1.msra.mxu0 0.0
    %196 = vmatprep.subr.mxu0 0.0
    %197 = vmatpush1.msra.mxu0 0.0
    %198 = vmatprep.subr.mxu0 0.0
    %199 = vmatpush1.msra.mxu0 0.0
    %200 = vmatprep.subr.mxu0 0.0
    %201 = vmatpush1.msra.mxu0 0.0
    %202 = vmatprep.subr.mxu0 0.0
    %203 = vmatpush1.msra.mxu0 0.0
    %204 = vmatprep.subr.mxu0 0.0
    %205 = vmatpush1.msra.mxu0 0.0
    %206 = vmatprep.subr.mxu0 0.0
    %207 = vmatpush1.msra.mxu0 0.0
    %208 = vmatprep.subr.mxu0 0.0
    %209 = vmatpush1.msra.mxu0 0.0
    %210 = vmatprep.subr.mxu0 0.0
    %211 = vmatpush1.msra.mxu0 0.0
    %212 = vmatprep.subr.mxu0 0.0
    %213 = vmatpush1.msra.mxu0 0.0
    %214 = vmatprep.subr.mxu0 0.0
    %215 = vmatpush1.msra.mxu0 0.0
    %216 = vmatprep.subr.mxu0 0.0
    %217 = vmatpush1.msra.mxu0 0.0
    %218 = vmatprep.subr.mxu0 0.0
    %219 = vmatpush1.msra.mxu0 0.0
    %220 = vmatprep.subr.mxu0 0.0
    %221 = vmatpush1.msra.mxu0 0.0
    %222 = vmatprep.subr.mxu0 0.0
    %223 = vmatpush1.msra.mxu0 0.0
    %224 = vmatprep.subr.mxu0 0.0
    %225 = vmatpush1.msra.mxu0 0.0
    %226 = vmatprep.subr.mxu0 0.0
    %227 = vmatpush1.msra.mxu0 0.0
    %228 = vmatprep.subr.mxu0 0.0
    %229 = vmatpush1.msra.mxu0 0.0
    %230 = vmatprep.subr.mxu0 0.0
    %231 = vmatpush1.msra.mxu0 0.0
    %232 = vmatprep.subr.mxu0 0.0
    %233 = vmatpush1.msra.mxu0 0.0
    %234 = vmatprep.subr.mxu0 0.0
    %235 = vmatpush1.msra.mxu0 0.0
    %236 = vmatprep.subr.mxu0 0.0
    %237 = vmatpush1.msra.mxu0 0.0
    %238 = vmatprep.mubr.f32.mxu0 0.0
    %239 = vmatmul.mubr.f32.gmra.mrb[0].mxu0 %v172
    %v240 = vpop.f32.mrb[0].mxu0
    %v241 = vadd.f32 %v168, %v240
    %v242 = vpop.f32.mrb[0].mxu0
    %243 = vdwg.mxu0
    %v244 = vld [vmem:[%s4] sm:$0x1]
    %v246 = vlaneseq
    %v247 = vshrl.u32 %v246, 7
    %v248 = vsub.s32 0, %v247
    %v249 = vrot.slane %v244, %v248
    %v251 = vadd.f32 %v241, %v249
    %v252 = vmax.f32 %v251, 0.0
    %v253 = vld [vmem:[#allocation10] sm:$0xff]
    %v254 = vld [vmem:[#allocation10 + $0x8] sm:$0xff]
    %v255 = vld [vmem:[#allocation10 + $0x10] sm:$0xff]
    %v256 = vld [vmem:[#allocation10 + $0x18] sm:$0xff]
    %v257 = vld [vmem:[%s6] sm:$0x1]
    %v259 = vlaneseq
    %v260 = vshrl.u32 %v259, 7
    %v261 = vsub.s32 0, %v260
    %v262 = vrot.slane %v257, %v261
    %vm264 = vcmask 261120
    %v266 = vsel %vm264, %v252, 0
    %268 = vmatprep.subr.mxu0 0.0
    %269 = vmatpush1.msra.mxu0 %v253
    %270 = vmatprep.subr.mxu0 0.0
    %271 = vmatpush1.msra.mxu0 %v254
    %272 = vmatprep.subr.mxu0 0.0
    %273 = vmatpush1.msra.mxu0 %v255
    %274 = vmatprep.subr.mxu0 0.0
    %275 = vmatpush1.msra.mxu0 %v256
    %276 = vmatprep.subr.mxu0 0.0
    %277 = vmatpush1.msra.mxu0 0.0
    %278 = vmatprep.subr.mxu0 0.0
    %279 = vmatpush1.msra.mxu0 0.0
    %280 = vmatprep.subr.mxu0 0.0
    %281 = vmatpush1.msra.mxu0 0.0
    %282 = vmatprep.subr.mxu0 0.0
    %283 = vmatpush1.msra.mxu0 0.0
    %284 = vmatprep.subr.mxu0 0.0
    %285 = vmatpush1.msra.mxu0 0.0
    %286 = vmatprep.subr.mxu0 0.0
    %287 = vmatpush1.msra.mxu0 0.0
    %288 = vmatprep.subr.mxu0 0.0
    %289 = vmatpush1.msra.mxu0 0.0
    %290 = vmatprep.subr.mxu0 0.0
    %291 = vmatpush1.msra.mxu0 0.0
    %292 = vmatprep.subr.mxu0 0.0
    %293 = vmatpush1.msra.mxu0 0.0
    %294 = vmatprep.subr.mxu0 0.0
    %295 = vmatpush1.msra.mxu0 0.0
    %296 = vmatprep.subr.mxu0 0.0
    %297 = vmatpush1.msra.mxu0 0.0
    %298 = vmatprep.subr.mxu0 0.0
    %299 = vmatpush1.msra.mxu0 0.0
    %300 = vmatprep.subr.mxu0 0.0
    %301 = vmatpush1.msra.mxu0 0.0
    %302 = vmatprep.subr.mxu0 0.0
    %303 = vmatpush1.msra.mxu0 0.0
    %304 = vmatprep.subr.mxu0 0.0
    %305 = vmatpush1.msra.mxu0 0.0
    %306 = vmatprep.subr.mxu0 0.0
    %307 = vmatpush1.msra.mxu0 0.0
    %308 = vmatprep.subr.mxu0 0.0
    %309 = vmatpush1.msra.mxu0 0.0
    %310 = vmatprep.subr.mxu0 0.0
    %311 = vmatpush1.msra.mxu0 0.0
    %312 = vmatprep.subr.mxu0 0.0
    %313 = vmatpush1.msra.mxu0 0.0
    %314 = vmatprep.subr.mxu0 0.0
    %315 = vmatpush1.msra.mxu0 0.0
    %316 = vmatprep.subr.mxu0 0.0
    %317 = vmatpush1.msra.mxu0 0.0
    %318 = vmatprep.subr.mxu0 0.0
    %319 = vmatpush1.msra.mxu0 0.0
    %320 = vmatprep.subr.mxu0 0.0
    %321 = vmatpush1.msra.mxu0 0.0
    %322 = vmatprep.subr.mxu0 0.0
    %323 = vmatpush1.msra.mxu0 0.0
    %324 = vmatprep.subr.mxu0 0.0
    %325 = vmatpush1.msra.mxu0 0.0
    %326 = vmatprep.subr.mxu0 0.0
    %327 = vmatpush1.msra.mxu0 0.0
    %328 = vmatprep.subr.mxu0 0.0
    %329 = vmatpush1.msra.mxu0 0.0
    %330 = vmatprep.subr.mxu0 0.0
    %331 = vmatpush1.msra.mxu0 0.0
    %332 = vmatprep.mubr.f32.mxu0 0.0
    %333 = vmatmul.mubr.f32.gmra.mrb[0].mxu0 %v266
    %v334 = vpop.f32.mrb[0].mxu0
    %v335 = vadd.f32 %v262, %v334
    %v336 = vpop.f32.mrb[0].mxu0
    %337 = vdwg.mxu0
    %vm338 = vcmask 64512
    %339 = vst.msk [vmem:[#allocation11] sm:$0xff] %vm338, %v335
    // Predicated region
    $region50: #{merge_layer.1} parent=1 // pred_check
      _
    $region51: #{merge_layer.1} parent=1 // pred_check_branch
      %341 = sbr.rel (0) target = $region53
    $region52: #{merge_layer.1} parent=1 // pred_region
      %s343 = ssub.s32 128, 128
      %344 = vsyncadd [#allocation4], %s343
      %s346 = sshll.u32 [#allocation11], 4
      %s347 = int_to_ptr.vmem [resolvable:$true] %s346
      %349 = dma.vmem_to_hbm [thread:$0]  %s347, 128, %s7, [#allocation4]
    $region53: #{merge_layer.1} parent=1 // pred_fallthru
      _
    // Predicated region
    $region54: #{merge_layer.1} parent=1 // pred_check
      _
    $region55: #{merge_layer.1} parent=1 // pred_check_branch
      %351 = sbr.rel (0) target = $region57
    $region56: #{merge_layer.1} parent=1 // pred_region
      %352 = dma.done [#allocation4], 128
    $region57: #{merge_layer.1} parent=1 // pred_fallthru
      _
    %353 = vsyncpa [#allocation3], 1
    %354 = vsyncpa [#allocation6], 1
    %355 = vsyncpa [#allocation9], 1
    %356 = vsyncpa [#allocation4], 1

</llo_original>
